<compile_context>
chip_gen: v7x
topology: tpu7x:2x2x1
jax: 0.10.0
libtpu: 0.0.40
codegen_flags: <defaults>
</compile_context>

<pallas_src>
import functools
import math

import jax
import jax.numpy as jnp
from jax.experimental import pallas as pl
from jax.experimental.pallas import tpu as pltpu


def _round_up(x, m):
    return ((x + m - 1) // m) * m


def _cdiv(a, b):
    return -(-a // b)


def _mlp_kernel(n_hidden, x_ref, w_first_ref, w_hid_ref, b_nh_ref,
                w_last_ref, b_last_ref, o_ref):
    """One batch tile of the whole MLP stack.

    x_ref      : (TILE_B, input_dim)
    w_first_ref: (input_dim, 128)          hidden width zero-padded to 128
    w_hid_ref  : (max(n_hidden, 1), 128, 128)
    b_nh_ref   : (n_hidden + 1, 1, 128)    biases of first + hidden layers
    w_last_ref : (128, output_dim)
    b_last_ref : (1, output_dim)
    o_ref      : (TILE_B, output_dim)
    """
    # First Linear + tanh (tanh lowers to the EUP slot -> cheap).
    h = jnp.tanh(
        jnp.dot(x_ref[...], w_first_ref[...],
                preferred_element_type=jnp.float32) + b_nh_ref[0])
    # Hidden Linear + tanh layers (static unroll; weights stay in VMEM).
    for i in range(n_hidden):
        h = jnp.tanh(
            jnp.dot(h, w_hid_ref[i],
                    preferred_element_type=jnp.float32) + b_nh_ref[i + 1])
    # Final Linear, no activation.  Narrow (output_dim-wide) store; rows past
    # the real batch in a partial last block are masked out by Pallas.
    o_ref[...] = (jnp.dot(h, w_last_ref[...],
                          preferred_element_type=jnp.float32)
                  + b_last_ref[...]).astype(o_ref.dtype)


def init_mlp_params(key, input_dim, output_dim, hidden_layers, neurons_per_layer,
                    dtype=jnp.float32):
    """PyTorch-style init. Returns list of (W(in, out), b(out,)) per Linear."""
    dims = [input_dim] + [neurons_per_layer] * (hidden_layers + 1) + [output_dim]
    params = []
    for i in range(len(dims) - 1):
        fan_in, fan_out = dims[i], dims[i + 1]
        key, kw, kb = jax.random.split(key, 3)
        bound = 1.0 / math.sqrt(fan_in)
        w = jax.random.uniform(kw, (fan_in, fan_out), dtype, -bound, bound)
        b = jax.random.uniform(kb, (fan_out,), dtype, -bound, bound)
        params.append((w, b))
    return params


def pack_mlp_params(params, dtype=jnp.float32):
    """Pack per-layer (W, b) into 5 padded/stacked arrays for the kernel.

    Hidden width is zero-padded to a multiple of 128 so every intermediate is
    lane-dense.  Zero padding is exact: padded activation columns are
    tanh(0) = 0 and multiply zero weight rows in the next layer.
    """
    n_layers = len(params)
    n_hidden = n_layers - 2          # Linear layers between first and last
    assert n_hidden >= 0
    input_dim = params[0][0].shape[0]
    n = params[0][0].shape[1]        # neurons_per_layer
    output_dim = params[-1][0].shape[1]
    n_pad = _round_up(max(n, 128), 128)

    w_first = jnp.zeros((input_dim, n_pad), dtype).at[:, :n].set(
        params[0][0].astype(dtype))

    w_hid = jnp.zeros((max(n_hidden, 1), n_pad, n_pad), dtype)
    for i in range(n_hidden):
        w_hid = w_hid.at[i, :n, :n].set(params[1 + i][0].astype(dtype))

    b_nh = jnp.zeros((n_hidden + 1, 1, n_pad), dtype)
    for i in range(n_hidden + 1):
        b_nh = b_nh.at[i, 0, :n].set(params[i][1].astype(dtype))

    w_last = jnp.zeros((n_pad, output_dim), dtype).at[:n, :].set(
        params[-1][0].astype(dtype))
    b_last = params[-1][1].reshape(1, output_dim).astype(dtype)

    meta = dict(n_hidden=n_hidden, input_dim=input_dim, output_dim=output_dim,
                n=n, n_pad=n_pad)
    return (w_first, w_hid, b_nh, w_last, b_last), meta


def _choose_tile_b(batch, tile_cap):
    """Batch tile size: single step for small problems, even step count for
    large ones (v7x megacore).  Always a multiple of 8."""
    if batch <= tile_cap:
        return _round_up(batch, 8)                 # grid = (1,)
    tb = _round_up(tile_cap, 8)
    steps = _cdiv(batch, tb)
    if steps % 2 == 1:                             # make step count even
        tb = _round_up(_cdiv(batch, steps + 1), 8)
    return tb


def mlp_forward(x, packed, meta, *, tile_cap=2048):
    """x: (batch, input_dim) float32.  Returns (batch, output_dim)."""
    w_first, w_hid, b_nh, w_last, b_last = packed
    batch, input_dim = x.shape
    assert input_dim == meta["input_dim"]
    n_hidden, output_dim = meta["n_hidden"], meta["output_dim"]

    tb = _choose_tile_b(batch, tile_cap)
    grid = (_cdiv(batch, tb),)                     # partial last block allowed

    kernel = functools.partial(_mlp_kernel, n_hidden)

    out = pl.pallas_call(
        kernel,
        out_shape=jax.ShapeDtypeStruct((batch, output_dim), x.dtype),
        grid_spec=pltpu.PrefetchScalarGridSpec(
            num_scalar_prefetch=0,
            grid=grid,
            in_specs=[
                pl.BlockSpec((tb, input_dim), lambda i: (i, 0)),   # batch-tiled
                pl.BlockSpec(w_first.shape, lambda i: (0, 0)),     # resident
                pl.BlockSpec(w_hid.shape, lambda i: (0, 0, 0)),    # resident
                pl.BlockSpec(b_nh.shape, lambda i: (0, 0, 0)),     # resident
                pl.BlockSpec(w_last.shape, lambda i: (0, 0)),      # resident
                pl.BlockSpec(b_last.shape, lambda i: (0, 0)),      # resident
            ],
            out_specs=pl.BlockSpec((tb, output_dim), lambda i: (i, 0)),
        ),
        compiler_params=pltpu.CompilerParams(
            dimension_semantics=("parallel",)),    # v7x: shard batch over 2 TCs
    )(x.astype(w_first.dtype), w_first, w_hid, b_nh, w_last, b_last)

    return out


def mlp_reference(x, params):
    """Plain-JAX reference identical to the PyTorch module."""
    h = x
    for li, (w, b) in enumerate(params):
        h = h @ w + b
        if li < len(params) - 1:
            h = jnp.tanh(h)
    return h


if __name__ == "__main__":
    # Module config: MLP(input_dim=4, output_dim=2, hidden_layers=4,
    #                    neurons_per_layer=32, activation='tanh')
    input_dim, output_dim = 4, 2
    hidden_layers, neurons_per_layer = 4, 32
    batch = 8

    key = jax.random.PRNGKey(0)
    key, kx = jax.random.split(key)
    x = jax.random.normal(kx, (batch, input_dim), dtype=jnp.float32)

    params = init_mlp_params(key, input_dim, output_dim, hidden_layers,
                             neurons_per_layer)
    packed, meta = pack_mlp_params(params)

    # Small batch: single-step grid (no per-step overhead), no wrapper padding.
    out = jax.block_until_ready(mlp_forward(x, packed, meta))
    ref = mlp_reference(x, params)
    assert out.shape == (batch, output_dim)
    assert jnp.allclose(out, ref, atol=1e-5, rtol=1e-5)

    # Second case: batch not a multiple of the tile -> multi-step parallel
    # grid with resident weights and a masked partial last block.
    key, kx2 = jax.random.split(key)
    x2 = jax.random.normal(kx2, (50, input_dim), dtype=jnp.float32)
    out2 = jax.block_until_ready(mlp_forward(x2, packed, meta, tile_cap=16))
    ref2 = mlp_reference(x2, params)
    assert out2.shape == (50, output_dim)
    assert jnp.allclose(out2, ref2, atol=1e-5, rtol=1e-5)

    print("KERNEL_OK")
</pallas_src>

<mosaic_0001>
module attributes {stable_mosaic.version = 11 : i64} {
  func.func @_mlp_kernel(%arg0: i32, %arg1: memref<8x4xf32, #tpu.memory_space<vmem>>, %arg2: memref<4x128xf32, #tpu.memory_space<vmem>>, %arg3: memref<4x128x128xf32, #tpu.memory_space<vmem>>, %arg4: memref<5x1x128xf32, #tpu.memory_space<vmem>>, %arg5: memref<128x2xf32, #tpu.memory_space<vmem>>, %arg6: memref<1x2xf32, #tpu.memory_space<vmem>>, %arg7: memref<8x2xf32, #tpu.memory_space<vmem>>) attributes {dimension_semantics = [#tpu.dimension_semantics<parallel>], iteration_bounds = array<i64: 1>, scalar_prefetch = 0 : i64, scratch_operands = 0 : i64, tpu.core_type = #tpu.core_type<tc>, window_params = [{transform_indices = @transform_0, window_bounds = array<i64: 8, 4>}, {pipeline_mode = #tpu.pipeline_mode<synchronous>, transform_indices = @transform_1, window_bounds = array<i64: 4, 128>}, {pipeline_mode = #tpu.pipeline_mode<synchronous>, transform_indices = @transform_2, window_bounds = array<i64: 4, 128, 128>}, {pipeline_mode = #tpu.pipeline_mode<synchronous>, transform_indices = @transform_3, window_bounds = array<i64: 5, 1, 128>}, {pipeline_mode = #tpu.pipeline_mode<synchronous>, transform_indices = @transform_4, window_bounds = array<i64: 128, 2>}, {pipeline_mode = #tpu.pipeline_mode<synchronous>, transform_indices = @transform_5, window_bounds = array<i64: 1, 2>}, {transform_indices = @transform_6, window_bounds = array<i64: 8, 2>}]} {
    %c0 = arith.constant 0 : index
    %c0_0 = arith.constant 0 : index
    %0 = vector.load %arg1[%c0, %c0_0] : memref<8x4xf32, #tpu.memory_space<vmem>>, vector<8x4xf32>
    %c0_1 = arith.constant 0 : index
    %c0_2 = arith.constant 0 : index
    %1 = vector.load %arg2[%c0_1, %c0_2] : memref<4x128xf32, #tpu.memory_space<vmem>>, vector<4x128xf32>
    %cst = arith.constant dense<0.000000e+00> : vector<8x128xf32>
    %2 = tpu.matmul %0, %1, %cst {dimension_numbers = #tpu.dot_dimension_numbers<[1], [0], [0], [1], [0, 0, 1, 1], [], []>} : vector<8x4xf32>, vector<4x128xf32>, vector<8x128xf32> -> vector<8x128xf32>
    %c0_3 = arith.constant 0 : index
    %c0_4 = arith.constant 0 : index
    %c0_5 = arith.constant 0 : index
    %3 = vector.load %arg4[%c0_3, %c0_4, %c0_5] : memref<5x1x128xf32, #tpu.memory_space<vmem>>, vector<1x1x128xf32>
    %4 = vector.shape_cast %3 : vector<1x1x128xf32> to vector<1x128xf32>
    %5 = vector.broadcast %4 : vector<1x128xf32> to vector<8x128xf32>
    %6 = arith.addf %2, %5 : vector<8x128xf32>
    %7 = math.tanh %6 : vector<8x128xf32>
    %c0_6 = arith.constant 0 : index
    %c0_7 = arith.constant 0 : index
    %c0_8 = arith.constant 0 : index
    %8 = vector.load %arg3[%c0_6, %c0_7, %c0_8] : memref<4x128x128xf32, #tpu.memory_space<vmem>>, vector<1x128x128xf32>
    %9 = vector.shape_cast %8 : vector<1x128x128xf32> to vector<128x128xf32>
    %cst_9 = arith.constant dense<0.000000e+00> : vector<8x128xf32>
    %10 = tpu.matmul %7, %9, %cst_9 {dimension_numbers = #tpu.dot_dimension_numbers<[1], [0], [0], [1], [0, 0, 1, 1], [], []>} : vector<8x128xf32>, vector<128x128xf32>, vector<8x128xf32> -> vector<8x128xf32>
    %c1 = arith.constant 1 : index
    %c0_10 = arith.constant 0 : index
    %c0_11 = arith.constant 0 : index
    %11 = vector.load %arg4[%c1, %c0_10, %c0_11] : memref<5x1x128xf32, #tpu.memory_space<vmem>>, vector<1x1x128xf32>
    %12 = vector.shape_cast %11 : vector<1x1x128xf32> to vector<1x128xf32>
    %13 = vector.broadcast %12 : vector<1x128xf32> to vector<8x128xf32>
    %14 = arith.addf %10, %13 : vector<8x128xf32>
    %15 = math.tanh %14 : vector<8x128xf32>
    %c1_12 = arith.constant 1 : index
    %c0_13 = arith.constant 0 : index
    %c0_14 = arith.constant 0 : index
    %16 = vector.load %arg3[%c1_12, %c0_13, %c0_14] : memref<4x128x128xf32, #tpu.memory_space<vmem>>, vector<1x128x128xf32>
    %17 = vector.shape_cast %16 : vector<1x128x128xf32> to vector<128x128xf32>
    %cst_15 = arith.constant dense<0.000000e+00> : vector<8x128xf32>
    %18 = tpu.matmul %15, %17, %cst_15 {dimension_numbers = #tpu.dot_dimension_numbers<[1], [0], [0], [1], [0, 0, 1, 1], [], []>} : vector<8x128xf32>, vector<128x128xf32>, vector<8x128xf32> -> vector<8x128xf32>
    %c2 = arith.constant 2 : index
    %c0_16 = arith.constant 0 : index
    %c0_17 = arith.constant 0 : index
    %19 = vector.load %arg4[%c2, %c0_16, %c0_17] : memref<5x1x128xf32, #tpu.memory_space<vmem>>, vector<1x1x128xf32>
    %20 = vector.shape_cast %19 : vector<1x1x128xf32> to vector<1x128xf32>
    %21 = vector.broadcast %20 : vector<1x128xf32> to vector<8x128xf32>
    %22 = arith.addf %18, %21 : vector<8x128xf32>
    %23 = math.tanh %22 : vector<8x128xf32>
    %c2_18 = arith.constant 2 : index
    %c0_19 = arith.constant 0 : index
    %c0_20 = arith.constant 0 : index
    %24 = vector.load %arg3[%c2_18, %c0_19, %c0_20] : memref<4x128x128xf32, #tpu.memory_space<vmem>>, vector<1x128x128xf32>
    %25 = vector.shape_cast %24 : vector<1x128x128xf32> to vector<128x128xf32>
    %cst_21 = arith.constant dense<0.000000e+00> : vector<8x128xf32>
    %26 = tpu.matmul %23, %25, %cst_21 {dimension_numbers = #tpu.dot_dimension_numbers<[1], [0], [0], [1], [0, 0, 1, 1], [], []>} : vector<8x128xf32>, vector<128x128xf32>, vector<8x128xf32> -> vector<8x128xf32>
    %c3 = arith.constant 3 : index
    %c0_22 = arith.constant 0 : index
    %c0_23 = arith.constant 0 : index
    %27 = vector.load %arg4[%c3, %c0_22, %c0_23] : memref<5x1x128xf32, #tpu.memory_space<vmem>>, vector<1x1x128xf32>
    %28 = vector.shape_cast %27 : vector<1x1x128xf32> to vector<1x128xf32>
    %29 = vector.broadcast %28 : vector<1x128xf32> to vector<8x128xf32>
    %30 = arith.addf %26, %29 : vector<8x128xf32>
    %31 = math.tanh %30 : vector<8x128xf32>
    %c3_24 = arith.constant 3 : index
    %c0_25 = arith.constant 0 : index
    %c0_26 = arith.constant 0 : index
    %32 = vector.load %arg3[%c3_24, %c0_25, %c0_26] : memref<4x128x128xf32, #tpu.memory_space<vmem>>, vector<1x128x128xf32>
    %33 = vector.shape_cast %32 : vector<1x128x128xf32> to vector<128x128xf32>
    %cst_27 = arith.constant dense<0.000000e+00> : vector<8x128xf32>
    %34 = tpu.matmul %31, %33, %cst_27 {dimension_numbers = #tpu.dot_dimension_numbers<[1], [0], [0], [1], [0, 0, 1, 1], [], []>} : vector<8x128xf32>, vector<128x128xf32>, vector<8x128xf32> -> vector<8x128xf32>
    %c4 = arith.constant 4 : index
    %c0_28 = arith.constant 0 : index
    %c0_29 = arith.constant 0 : index
    %35 = vector.load %arg4[%c4, %c0_28, %c0_29] : memref<5x1x128xf32, #tpu.memory_space<vmem>>, vector<1x1x128xf32>
    %36 = vector.shape_cast %35 : vector<1x1x128xf32> to vector<1x128xf32>
    %37 = vector.broadcast %36 : vector<1x128xf32> to vector<8x128xf32>
    %38 = arith.addf %34, %37 : vector<8x128xf32>
    %39 = math.tanh %38 : vector<8x128xf32>
    %c0_30 = arith.constant 0 : index
    %c0_31 = arith.constant 0 : index
    %40 = vector.load %arg5[%c0_30, %c0_31] : memref<128x2xf32, #tpu.memory_space<vmem>>, vector<128x2xf32>
    %cst_32 = arith.constant dense<0.000000e+00> : vector<8x2xf32>
    %41 = tpu.matmul %39, %40, %cst_32 {dimension_numbers = #tpu.dot_dimension_numbers<[1], [0], [0], [1], [0, 0, 1, 1], [], []>} : vector<8x128xf32>, vector<128x2xf32>, vector<8x2xf32> -> vector<8x2xf32>
    %c0_33 = arith.constant 0 : index
    %c0_34 = arith.constant 0 : index
    %42 = vector.load %arg6[%c0_33, %c0_34] : memref<1x2xf32, #tpu.memory_space<vmem>>, vector<1x2xf32>
    %43 = vector.broadcast %42 : vector<1x2xf32> to vector<8x2xf32>
    %44 = arith.addf %41, %43 : vector<8x2xf32>
    %c0_35 = arith.constant 0 : index
    %c0_36 = arith.constant 0 : index
    %45 = vector.load %arg7[%c0_35, %c0_36] : memref<8x2xf32, #tpu.memory_space<vmem>>, vector<8x2xf32>
    tpu.vector_store %arg7[%c0_35, %c0_36], %44 {strides = array<i32>} : memref<8x2xf32, #tpu.memory_space<vmem>>, vector<8x2xf32>,
    return
  }
  func.func @transform_0(%arg0: i32) -> (i32, i32) {
    %c0_i32 = arith.constant 0 : i32
    %c0_i32_0 = arith.constant 0 : i32
    return %arg0, %c0_i32 : i32, i32
  }
  func.func @transform_1(%arg0: i32) -> (i32, i32) {
    %c0_i32 = arith.constant 0 : i32
    %c0_i32_0 = arith.constant 0 : i32
    %c0_i32_1 = arith.constant 0 : i32
    return %c0_i32, %c0_i32_0 : i32, i32
  }
  func.func @transform_2(%arg0: i32) -> (i32, i32, i32) {
    %c0_i32 = arith.constant 0 : i32
    %c0_i32_0 = arith.constant 0 : i32
    %c0_i32_1 = arith.constant 0 : i32
    %c0_i32_2 = arith.constant 0 : i32
    return %c0_i32, %c0_i32_0, %c0_i32_1 : i32, i32, i32
  }
  func.func @transform_3(%arg0: i32) -> (i32, i32, i32) {
    %c0_i32 = arith.constant 0 : i32
    %c0_i32_0 = arith.constant 0 : i32
    %c0_i32_1 = arith.constant 0 : i32
    %c0_i32_2 = arith.constant 0 : i32
    return %c0_i32, %c0_i32_0, %c0_i32_1 : i32, i32, i32
  }
  func.func @transform_4(%arg0: i32) -> (i32, i32) {
    %c0_i32 = arith.constant 0 : i32
    %c0_i32_0 = arith.constant 0 : i32
    %c0_i32_1 = arith.constant 0 : i32
    return %c0_i32, %c0_i32_0 : i32, i32
  }
  func.func @transform_5(%arg0: i32) -> (i32, i32) {
    %c0_i32 = arith.constant 0 : i32
    %c0_i32_0 = arith.constant 0 : i32
    %c0_i32_1 = arith.constant 0 : i32
    return %c0_i32, %c0_i32_0 : i32, i32
  }
  func.func @transform_6(%arg0: i32) -> (i32, i32) {
    %c0_i32 = arith.constant 0 : i32
    %c0_i32_0 = arith.constant 0 : i32
    return %arg0, %c0_i32 : i32, i32
  }
}

</mosaic_0001>

<llo_original>
// kernel: tpu_custom_call.1
$region0: #{tpu_custom_call.1}
  #allocation0 [shape = 'u32[]', space=smem, size = 0x4, offset = 0x4, fixed_abs, tag = 'smem constant byte address 0x4 - core index']
  #allocation1 [shape = 'u32[144,128]{1,0:T(1,128)}', space=vmem, size = 0x12000, scoped, tag = 'internal scratch']
  %s0 = inlined_call_operand.vmem [shape: f32[8,4], index: 0, kind: input, shape index: {}]
  %s1 = inlined_call_operand.vmem [shape: f32[4,128], index: 1, kind: input, shape index: {}]
  %s2 = inlined_call_operand.hbm [shape: f32[4,128,128], index: 2, kind: input, shape index: {}]
  %s3 = inlined_call_operand.vmem [shape: f32[5,1,128], index: 3, kind: input, shape index: {}]
  %s4 = inlined_call_operand.vmem [shape: f32[128,2], index: 4, kind: input, shape index: {}]
  %s5 = inlined_call_operand.vmem [shape: f32[1,2], index: 5, kind: input, shape index: {}]
  %s6 = inlined_call_operand.vmem [shape: f32[8,2], index: 6, kind: output, shape index: {}]
  %s7 = sld [smem:[#allocation0]]
  $region38: #{tpu_custom_call.1} parent=0
    _
  %s9 = ssub.s32 1, %s7
  %s10 = scalar_select 0, %s9, %s7
  $region1: #{tpu_custom_call.1} parent=0
    #allocation2 [shape = 'u8[262144]{0}', space=vmem, size = 0x40000, scoped, tag = 'input window, operand 2, single buffered']
    #allocation3 [shape = 's32[1]{0}', space=sflag, size = 0x4, scoped, tag = 'scoped memory for tpu_custom_call.1']
    %11 = vsyncpa [#allocation3], 0
    // Predicated region
    $region2: #{tpu_custom_call.1} parent=1 // pred_check
      _
    $region3: #{tpu_custom_call.1} parent=1 // pred_check_branch
      %13 = sbr.rel (0) target = $region5
    $region4: #{tpu_custom_call.1} parent=1 // pred_region
      _
    $region5: #{tpu_custom_call.1} parent=1 // pred_fallthru
      _
    // Predicated region
    $region6: #{tpu_custom_call.1} parent=1 // pred_check
      _
    $region7: #{tpu_custom_call.1} parent=1 // pred_check_branch
      %15 = sbr.rel (0) target = $region9
    $region8: #{tpu_custom_call.1} parent=1 // pred_region
      _
    $region9: #{tpu_custom_call.1} parent=1 // pred_fallthru
      _
    // Predicated region
    $region10: #{tpu_custom_call.1} parent=1 // pred_check
      _
    $region11: #{tpu_custom_call.1} parent=1 // pred_check_branch
      %17 = sbr.rel (0) target = $region13
    $region12: #{tpu_custom_call.1} parent=1 // pred_region
      %s19 = ssub.s32 8192, 8192
      %20 = vsyncadd [#allocation3], %s19
      %s21 = sshll.u32 [#allocation2], 4
      %s22 = int_to_ptr.vmem [resolvable:$true] %s21
      %27 = dma.hbm_to_vmem [thread:$0]  %s2, 8192, %s22, [#allocation3], 128, 128, 8
    $region13: #{tpu_custom_call.1} parent=1 // pred_fallthru
      _
    // Predicated region
    $region14: #{tpu_custom_call.1} parent=1 // pred_check
      _
    $region15: #{tpu_custom_call.1} parent=1 // pred_check_branch
      %29 = sbr.rel (0) target = $region17
    $region16: #{tpu_custom_call.1} parent=1 // pred_region
      _
    $region17: #{tpu_custom_call.1} parent=1 // pred_fallthru
      _
    // Predicated region
    $region18: #{tpu_custom_call.1} parent=1 // pred_check
      _
    $region19: #{tpu_custom_call.1} parent=1 // pred_check_branch
      %31 = sbr.rel (0) target = $region21
    $region20: #{tpu_custom_call.1} parent=1 // pred_region
      _
    $region21: #{tpu_custom_call.1} parent=1 // pred_fallthru
      _
    // Predicated region
    $region22: #{tpu_custom_call.1} parent=1 // pred_check
      _
    $region23: #{tpu_custom_call.1} parent=1 // pred_check_branch
      %33 = sbr.rel (0) target = $region25
    $region24: #{tpu_custom_call.1} parent=1 // pred_region
      _
    $region25: #{tpu_custom_call.1} parent=1 // pred_fallthru
      _
    // Predicated region
    $region26: #{tpu_custom_call.1} parent=1 // pred_check
      _
    $region27: #{tpu_custom_call.1} parent=1 // pred_check_branch
      %35 = sbr.rel (0) target = $region29
    $region28: #{tpu_custom_call.1} parent=1 // pred_region
      %36 = dma.done [#allocation3], 8192
    $region29: #{tpu_custom_call.1} parent=1 // pred_fallthru
      _
    %v37 = vld [vmem:[%s0] sm:$0xff]
    %v38 = vld [vmem:[%s1] sm:$0xf]
    %v39 = vld [vmem:[%s3] sm:$0x1]
    %v41 = vlaneseq
    %v42 = vshrl.u32 %v41, 7
    %v43 = vsub.s32 0, %v42
    %v44 = vrot.slane %v39, %v43
    %vm46 = vcmask 31744
    %v48 = vsel %vm46, %v37, 0
    %vm50 = vcmask 1043456
    %v52 = vsel %vm50, %v38, 0
    %54 = vmatprep.subr.mxu0 0.0
    %55 = vmatpush1.msra.mxu0 %v52
    %56 = vmatprep.subr.mxu0 0.0
    %57 = vmatpush1.msra.mxu0 0.0
    %58 = vmatprep.subr.mxu0 0.0
    %59 = vmatpush1.msra.mxu0 0.0
    %60 = vmatprep.subr.mxu0 0.0
    %61 = vmatpush1.msra.mxu0 0.0
    %62 = vmatprep.subr.mxu0 0.0
    %63 = vmatpush1.msra.mxu0 0.0
    %64 = vmatprep.subr.mxu0 0.0
    %65 = vmatpush1.msra.mxu0 0.0
    %66 = vmatprep.subr.mxu0 0.0
    %67 = vmatpush1.msra.mxu0 0.0
    %68 = vmatprep.subr.mxu0 0.0
    %69 = vmatpush1.msra.mxu0 0.0
    %70 = vmatprep.subr.mxu0 0.0
    %71 = vmatpush1.msra.mxu0 0.0
    %72 = vmatprep.subr.mxu0 0.0
    %73 = vmatpush1.msra.mxu0 0.0
    %74 = vmatprep.subr.mxu0 0.0
    %75 = vmatpush1.msra.mxu0 0.0
    %76 = vmatprep.subr.mxu0 0.0
    %77 = vmatpush1.msra.mxu0 0.0
    %78 = vmatprep.subr.mxu0 0.0
    %79 = vmatpush1.msra.mxu0 0.0
    %80 = vmatprep.subr.mxu0 0.0
    %81 = vmatpush1.msra.mxu0 0.0
    %82 = vmatprep.subr.mxu0 0.0
    %83 = vmatpush1.msra.mxu0 0.0
    %84 = vmatprep.subr.mxu0 0.0
    %85 = vmatpush1.msra.mxu0 0.0
    %86 = vmatprep.subr.mxu0 0.0
    %87 = vmatpush1.msra.mxu0 0.0
    %88 = vmatprep.subr.mxu0 0.0
    %89 = vmatpush1.msra.mxu0 0.0
    %90 = vmatprep.subr.mxu0 0.0
    %91 = vmatpush1.msra.mxu0 0.0
    %92 = vmatprep.subr.mxu0 0.0
    %93 = vmatpush1.msra.mxu0 0.0
    %94 = vmatprep.subr.mxu0 0.0
    %95 = vmatpush1.msra.mxu0 0.0
    %96 = vmatprep.subr.mxu0 0.0
    %97 = vmatpush1.msra.mxu0 0.0
    %98 = vmatprep.subr.mxu0 0.0
    %99 = vmatpush1.msra.mxu0 0.0
    %100 = vmatprep.subr.mxu0 0.0
    %101 = vmatpush1.msra.mxu0 0.0
    %102 = vmatprep.subr.mxu0 0.0
    %103 = vmatpush1.msra.mxu0 0.0
    %104 = vmatprep.subr.mxu0 0.0
    %105 = vmatpush1.msra.mxu0 0.0
    %106 = vmatprep.subr.mxu0 0.0
    %107 = vmatpush1.msra.mxu0 0.0
    %108 = vmatprep.subr.mxu0 0.0
    %109 = vmatpush1.msra.mxu0 0.0
    %110 = vmatprep.subr.mxu0 0.0
    %111 = vmatpush1.msra.mxu0 0.0
    %112 = vmatprep.subr.mxu0 0.0
    %113 = vmatpush1.msra.mxu0 0.0
    %114 = vmatprep.subr.mxu0 0.0
    %115 = vmatpush1.msra.mxu0 0.0
    %116 = vmatprep.subr.mxu0 0.0
    %117 = vmatpush1.msra.mxu0 0.0
    %118 = vmatprep.mubr.f32.mxu0 0.0
    %119 = vmatmul.mubr.f32.gmra.mrb[0].mxu0 %v48
    %v120 = vpop.f32.mrb[0].mxu0
    %v121 = vadd.f32 %v44, %v120
    %v122 = vpop.f32.mrb[0].mxu0
    %123 = vdwg.mxu0
    %v124 = vtanh.pop %v121
    %v125 = vld [vmem:[#allocation2] sm:$0xff]
    %v126 = vld [vmem:[#allocation2 + $0x8] sm:$0xff]
    %v127 = vld [vmem:[#allocation2 + $0x10] sm:$0xff]
    %v128 = vld [vmem:[#allocation2 + $0x18] sm:$0xff]
    %v129 = vld [vmem:[#allocation2 + $0x20] sm:$0xff]
    %v130 = vld [vmem:[#allocation2 + $0x28] sm:$0xff]
    %v131 = vld [vmem:[#allocation2 + $0x30] sm:$0xff]
    %v132 = vld [vmem:[#allocation2 + $0x38] sm:$0xff]
    %v133 = vld [vmem:[#allocation2 + $0x40] sm:$0xff]
    %v134 = vld [vmem:[#allocation2 + $0x48] sm:$0xff]
    %v135 = vld [vmem:[#allocation2 + $0x50] sm:$0xff]
    %v136 = vld [vmem:[#allocation2 + $0x58] sm:$0xff]
    %v137 = vld [vmem:[#allocation2 + $0x60] sm:$0xff]
    %v138 = vld [vmem:[#allocation2 + $0x68] sm:$0xff]
    %v139 = vld [vmem:[#allocation2 + $0x70] sm:$0xff]
    %v140 = vld [vmem:[#allocation2 + $0x78] sm:$0xff]
    %s141 = scalar_lea.vmem %s3, 1
    %v142 = vld [vmem:[%s141] sm:$0x1]
    %v144 = vlaneseq
    %v145 = vshrl.u32 %v144, 7
    %v146 = vsub.s32 0, %v145
    %v147 = vrot.slane %v142, %v146
    %149 = vmatprep.subr.mxu0 0.0
    %150 = vmatpush1.msra.mxu0 %v125
    %151 = vmatprep.subr.mxu0 0.0
    %152 = vmatpush1.msra.mxu0 %v126
    %153 = vmatprep.subr.mxu0 0.0
    %154 = vmatpush1.msra.mxu0 %v127
    %155 = vmatprep.subr.mxu0 0.0
    %156 = vmatpush1.msra.mxu0 %v128
    %157 = vmatprep.subr.mxu0 0.0
    %158 = vmatpush1.msra.mxu0 %v129
    %159 = vmatprep.subr.mxu0 0.0
    %160 = vmatpush1.msra.mxu0 %v130
    %161 = vmatprep.subr.mxu0 0.0
    %162 = vmatpush1.msra.mxu0 %v131
    %163 = vmatprep.subr.mxu0 0.0
    %164 = vmatpush1.msra.mxu0 %v132
    %165 = vmatprep.subr.mxu0 0.0
    %166 = vmatpush1.msra.mxu0 %v133
    %167 = vmatprep.subr.mxu0 0.0
    %168 = vmatpush1.msra.mxu0 %v134
    %169 = vmatprep.subr.mxu0 0.0
    %170 = vmatpush1.msra.mxu0 %v135
    %171 = vmatprep.subr.mxu0 0.0
    %172 = vmatpush1.msra.mxu0 %v136
    %173 = vmatprep.subr.mxu0 0.0
    %174 = vmatpush1.msra.mxu0 %v137
    %175 = vmatprep.subr.mxu0 0.0
    %176 = vmatpush1.msra.mxu0 %v138
    %177 = vmatprep.subr.mxu0 0.0
    %178 = vmatpush1.msra.mxu0 %v139
    %179 = vmatprep.subr.mxu0 0.0
    %180 = vmatpush1.msra.mxu0 %v140
    %181 = vmatprep.subr.mxu0 0.0
    %182 = vmatpush1.msra.mxu0 0.0
    %183 = vmatprep.subr.mxu0 0.0
    %184 = vmatpush1.msra.mxu0 0.0
    %185 = vmatprep.subr.mxu0 0.0
    %186 = vmatpush1.msra.mxu0 0.0
    %187 = vmatprep.subr.mxu0 0.0
    %188 = vmatpush1.msra.mxu0 0.0
    %189 = vmatprep.subr.mxu0 0.0
    %190 = vmatpush1.msra.mxu0 0.0
    %191 = vmatprep.subr.mxu0 0.0
    %192 = vmatpush1.msra.mxu0 0.0
    %193 = vmatprep.subr.mxu0 0.0
    %194 = vmatpush1.msra.mxu0 0.0
    %195 = vmatprep.subr.mxu0 0.0
    %196 = vmatpush1.msra.mxu0 0.0
    %197 = vmatprep.subr.mxu0 0.0
    %198 = vmatpush1.msra.mxu0 0.0
    %199 = vmatprep.subr.mxu0 0.0
    %200 = vmatpush1.msra.mxu0 0.0
    %201 = vmatprep.subr.mxu0 0.0
    %202 = vmatpush1.msra.mxu0 0.0
    %203 = vmatprep.subr.mxu0 0.0
    %204 = vmatpush1.msra.mxu0 0.0
    %205 = vmatprep.subr.mxu0 0.0
    %206 = vmatpush1.msra.mxu0 0.0
    %207 = vmatprep.subr.mxu0 0.0
    %208 = vmatpush1.msra.mxu0 0.0
    %209 = vmatprep.subr.mxu0 0.0
    %210 = vmatpush1.msra.mxu0 0.0
    %211 = vmatprep.subr.mxu0 0.0
    %212 = vmatpush1.msra.mxu0 0.0
    %213 = vmatprep.mubr.f32.mxu0 0.0
    %214 = vmatmul.mubr.f32.gmra.mrb[0].mxu0 %v124
    %v215 = vpop.f32.mrb[0].mxu0
    %v216 = vadd.f32 %v147, %v215
    %v217 = vpop.f32.mrb[0].mxu0
    %218 = vdwg.mxu0
    %v219 = vtanh.pop %v216
    %s220 = scalar_lea.vmem [#allocation2], 128
    %v221 = vld [vmem:[%s220] sm:$0xff]
    %v222 = vld [vmem:[%s220 + $0x8] sm:$0xff]
    %v223 = vld [vmem:[%s220 + $0x10] sm:$0xff]
    %v224 = vld [vmem:[%s220 + $0x18] sm:$0xff]
    %v225 = vld [vmem:[%s220 + $0x20] sm:$0xff]
    %v226 = vld [vmem:[%s220 + $0x28] sm:$0xff]
    %v227 = vld [vmem:[%s220 + $0x30] sm:$0xff]
    %v228 = vld [vmem:[%s220 + $0x38] sm:$0xff]
    %v229 = vld [vmem:[%s220 + $0x40] sm:$0xff]
    %v230 = vld [vmem:[%s220 + $0x48] sm:$0xff]
    %v231 = vld [vmem:[%s220 + $0x50] sm:$0xff]
    %v232 = vld [vmem:[%s220 + $0x58] sm:$0xff]
    %v233 = vld [vmem:[%s220 + $0x60] sm:$0xff]
    %v234 = vld [vmem:[%s220 + $0x68] sm:$0xff]
    %v235 = vld [vmem:[%s220 + $0x70] sm:$0xff]
    %v236 = vld [vmem:[%s220 + $0x78] sm:$0xff]
    %s237 = scalar_lea.vmem %s3, 2
    %v238 = vld [vmem:[%s237] sm:$0x1]
    %v240 = vlaneseq
    %v241 = vshrl.u32 %v240, 7
    %v242 = vsub.s32 0, %v241
    %v243 = vrot.slane %v238, %v242
    %245 = vmatprep.subr.mxu0 0.0
    %246 = vmatpush1.msra.mxu0 %v221
    %247 = vmatprep.subr.mxu0 0.0
    %248 = vmatpush1.msra.mxu0 %v222
    %249 = vmatprep.subr.mxu0 0.0
    %250 = vmatpush1.msra.mxu0 %v223
    %251 = vmatprep.subr.mxu0 0.0
    %252 = vmatpush1.msra.mxu0 %v224
    %253 = vmatprep.subr.mxu0 0.0
    %254 = vmatpush1.msra.mxu0 %v225
    %255 = vmatprep.subr.mxu0 0.0
    %256 = vmatpush1.msra.mxu0 %v226
    %257 = vmatprep.subr.mxu0 0.0
    %258 = vmatpush1.msra.mxu0 %v227
    %259 = vmatprep.subr.mxu0 0.0
    %260 = vmatpush1.msra.mxu0 %v228
    %261 = vmatprep.subr.mxu0 0.0
    %262 = vmatpush1.msra.mxu0 %v229
    %263 = vmatprep.subr.mxu0 0.0
    %264 = vmatpush1.msra.mxu0 %v230
    %265 = vmatprep.subr.mxu0 0.0
    %266 = vmatpush1.msra.mxu0 %v231
    %267 = vmatprep.subr.mxu0 0.0
    %268 = vmatpush1.msra.mxu0 %v232
    %269 = vmatprep.subr.mxu0 0.0
    %270 = vmatpush1.msra.mxu0 %v233
    %271 = vmatprep.subr.mxu0 0.0
    %272 = vmatpush1.msra.mxu0 %v234
    %273 = vmatprep.subr.mxu0 0.0
    %274 = vmatpush1.msra.mxu0 %v235
    %275 = vmatprep.subr.mxu0 0.0
    %276 = vmatpush1.msra.mxu0 %v236
    %277 = vmatprep.subr.mxu0 0.0
    %278 = vmatpush1.msra.mxu0 0.0
    %279 = vmatprep.subr.mxu0 0.0
    %280 = vmatpush1.msra.mxu0 0.0
    %281 = vmatprep.subr.mxu0 0.0
    %282 = vmatpush1.msra.mxu0 0.0
    %283 = vmatprep.subr.mxu0 0.0
    %284 = vmatpush1.msra.mxu0 0.0
    %285 = vmatprep.subr.mxu0 0.0
    %286 = vmatpush1.msra.mxu0 0.0
    %287 = vmatprep.subr.mxu0 0.0
    %288 = vmatpush1.msra.mxu0 0.0
    %289 = vmatprep.subr.mxu0 0.0
    %290 = vmatpush1.msra.mxu0 0.0
    %291 = vmatprep.subr.mxu0 0.0
    %292 = vmatpush1.msra.mxu0 0.0
    %293 = vmatprep.subr.mxu0 0.0
    %294 = vmatpush1.msra.mxu0 0.0
    %295 = vmatprep.subr.mxu0 0.0
    %296 = vmatpush1.msra.mxu0 0.0
    %297 = vmatprep.subr.mxu0 0.0
    %298 = vmatpush1.msra.mxu0 0.0
    %299 = vmatprep.subr.mxu0 0.0
    %300 = vmatpush1.msra.mxu0 0.0
    %301 = vmatprep.subr.mxu0 0.0
    %302 = vmatpush1.msra.mxu0 0.0
    %303 = vmatprep.subr.mxu0 0.0
    %304 = vmatpush1.msra.mxu0 0.0
    %305 = vmatprep.subr.mxu0 0.0
    %306 = vmatpush1.msra.mxu0 0.0
    %307 = vmatprep.subr.mxu0 0.0
    %308 = vmatpush1.msra.mxu0 0.0
    %309 = vmatprep.mubr.f32.mxu0 0.0
    %310 = vmatmul.mubr.f32.gmra.mrb[0].mxu0 %v219
    %v311 = vpop.f32.mrb[0].mxu0
    %v312 = vadd.f32 %v243, %v311
    %v313 = vpop.f32.mrb[0].mxu0
    %314 = vdwg.mxu0
    %v315 = vtanh.pop %v312
    %s316 = scalar_lea.vmem [#allocation2], 256
    %v317 = vld [vmem:[%s316] sm:$0xff]
    %v318 = vld [vmem:[%s316 + $0x8] sm:$0xff]
    %v319 = vld [vmem:[%s316 + $0x10] sm:$0xff]
    %v320 = vld [vmem:[%s316 + $0x18] sm:$0xff]
    %v321 = vld [vmem:[%s316 + $0x20] sm:$0xff]
    %v322 = vld [vmem:[%s316 + $0x28] sm:$0xff]
    %v323 = vld [vmem:[%s316 + $0x30] sm:$0xff]
    %v324 = vld [vmem:[%s316 + $0x38] sm:$0xff]
    %v325 = vld [vmem:[%s316 + $0x40] sm:$0xff]
    %v326 = vld [vmem:[%s316 + $0x48] sm:$0xff]
    %v327 = vld [vmem:[%s316 + $0x50] sm:$0xff]
    %v328 = vld [vmem:[%s316 + $0x58] sm:$0xff]
    %v329 = vld [vmem:[%s316 + $0x60] sm:$0xff]
    %v330 = vld [vmem:[%s316 + $0x68] sm:$0xff]
    %v331 = vld [vmem:[%s316 + $0x70] sm:$0xff]
    %v332 = vld [vmem:[%s316 + $0x78] sm:$0xff]
    %s333 = scalar_lea.vmem %s3, 3
    %v334 = vld [vmem:[%s333] sm:$0x1]
    %v336 = vlaneseq
    %v337 = vshrl.u32 %v336, 7
    %v338 = vsub.s32 0, %v337
    %v339 = vrot.slane %v334, %v338
    %341 = vmatprep.subr.mxu0 0.0
    %342 = vmatpush1.msra.mxu0 %v317
    %343 = vmatprep.subr.mxu0 0.0
    %344 = vmatpush1.msra.mxu0 %v318
    %345 = vmatprep.subr.mxu0 0.0
    %346 = vmatpush1.msra.mxu0 %v319
    %347 = vmatprep.subr.mxu0 0.0
    %348 = vmatpush1.msra.mxu0 %v320
    %349 = vmatprep.subr.mxu0 0.0
    %350 = vmatpush1.msra.mxu0 %v321
    %351 = vmatprep.subr.mxu0 0.0
    %352 = vmatpush1.msra.mxu0 %v322
    %353 = vmatprep.subr.mxu0 0.0
    %354 = vmatpush1.msra.mxu0 %v323
    %355 = vmatprep.subr.mxu0 0.0
    %356 = vmatpush1.msra.mxu0 %v324
    %357 = vmatprep.subr.mxu0 0.0
    %358 = vmatpush1.msra.mxu0 %v325
    %359 = vmatprep.subr.mxu0 0.0
    %360 = vmatpush1.msra.mxu0 %v326
    %361 = vmatprep.subr.mxu0 0.0
    %362 = vmatpush1.msra.mxu0 %v327
    %363 = vmatprep.subr.mxu0 0.0
    %364 = vmatpush1.msra.mxu0 %v328
    %365 = vmatprep.subr.mxu0 0.0
    %366 = vmatpush1.msra.mxu0 %v329
    %367 = vmatprep.subr.mxu0 0.0
    %368 = vmatpush1.msra.mxu0 %v330
    %369 = vmatprep.subr.mxu0 0.0
    %370 = vmatpush1.msra.mxu0 %v331
    %371 = vmatprep.subr.mxu0 0.0
    %372 = vmatpush1.msra.mxu0 %v332
    %373 = vmatprep.subr.mxu0 0.0
    %374 = vmatpush1.msra.mxu0 0.0
    %375 = vmatprep.subr.mxu0 0.0
    %376 = vmatpush1.msra.mxu0 0.0
    %377 = vmatprep.subr.mxu0 0.0
    %378 = vmatpush1.msra.mxu0 0.0
    %379 = vmatprep.subr.mxu0 0.0
    %380 = vmatpush1.msra.mxu0 0.0
    %381 = vmatprep.subr.mxu0 0.0
    %382 = vmatpush1.msra.mxu0 0.0
    %383 = vmatprep.subr.mxu0 0.0
    %384 = vmatpush1.msra.mxu0 0.0
    %385 = vmatprep.subr.mxu0 0.0
    %386 = vmatpush1.msra.mxu0 0.0
    %387 = vmatprep.subr.mxu0 0.0
    %388 = vmatpush1.msra.mxu0 0.0
    %389 = vmatprep.subr.mxu0 0.0
    %390 = vmatpush1.msra.mxu0 0.0
    %391 = vmatprep.subr.mxu0 0.0
    %392 = vmatpush1.msra.mxu0 0.0
    %393 = vmatprep.subr.mxu0 0.0
    %394 = vmatpush1.msra.mxu0 0.0
    %395 = vmatprep.subr.mxu0 0.0
    %396 = vmatpush1.msra.mxu0 0.0
    %397 = vmatprep.subr.mxu0 0.0
    %398 = vmatpush1.msra.mxu0 0.0
    %399 = vmatprep.subr.mxu0 0.0
    %400 = vmatpush1.msra.mxu0 0.0
    %401 = vmatprep.subr.mxu0 0.0
    %402 = vmatpush1.msra.mxu0 0.0
    %403 = vmatprep.subr.mxu0 0.0
    %404 = vmatpush1.msra.mxu0 0.0
    %405 = vmatprep.mubr.f32.mxu0 0.0
    %406 = vmatmul.mubr.f32.gmra.mrb[0].mxu0 %v315
    %v407 = vpop.f32.mrb[0].mxu0
    %v408 = vadd.f32 %v339, %v407
    %v409 = vpop.f32.mrb[0].mxu0
    %410 = vdwg.mxu0
    %v411 = vtanh.pop %v408
    %s412 = scalar_lea.vmem [#allocation2], 384
    %v413 = vld [vmem:[%s412] sm:$0xff]
    %v414 = vld [vmem:[%s412 + $0x8] sm:$0xff]
    %v415 = vld [vmem:[%s412 + $0x10] sm:$0xff]
    %v416 = vld [vmem:[%s412 + $0x18] sm:$0xff]
    %v417 = vld [vmem:[%s412 + $0x20] sm:$0xff]
    %v418 = vld [vmem:[%s412 + $0x28] sm:$0xff]
    %v419 = vld [vmem:[%s412 + $0x30] sm:$0xff]
    %v420 = vld [vmem:[%s412 + $0x38] sm:$0xff]
    %v421 = vld [vmem:[%s412 + $0x40] sm:$0xff]
    %v422 = vld [vmem:[%s412 + $0x48] sm:$0xff]
    %v423 = vld [vmem:[%s412 + $0x50] sm:$0xff]
    %v424 = vld [vmem:[%s412 + $0x58] sm:$0xff]
    %v425 = vld [vmem:[%s412 + $0x60] sm:$0xff]
    %v426 = vld [vmem:[%s412 + $0x68] sm:$0xff]
    %v427 = vld [vmem:[%s412 + $0x70] sm:$0xff]
    %v428 = vld [vmem:[%s412 + $0x78] sm:$0xff]
    %s429 = scalar_lea.vmem %s3, 4
    %v430 = vld [vmem:[%s429] sm:$0x1]
    %v432 = vlaneseq
    %v433 = vshrl.u32 %v432, 7
    %v434 = vsub.s32 0, %v433
    %v435 = vrot.slane %v430, %v434
    %437 = vmatprep.subr.mxu0 0.0
    %438 = vmatpush1.msra.mxu0 %v413
    %439 = vmatprep.subr.mxu0 0.0
    %440 = vmatpush1.msra.mxu0 %v414
    %441 = vmatprep.subr.mxu0 0.0
    %442 = vmatpush1.msra.mxu0 %v415
    %443 = vmatprep.subr.mxu0 0.0
    %444 = vmatpush1.msra.mxu0 %v416
    %445 = vmatprep.subr.mxu0 0.0
    %446 = vmatpush1.msra.mxu0 %v417
    %447 = vmatprep.subr.mxu0 0.0
    %448 = vmatpush1.msra.mxu0 %v418
    %449 = vmatprep.subr.mxu0 0.0
    %450 = vmatpush1.msra.mxu0 %v419
    %451 = vmatprep.subr.mxu0 0.0
    %452 = vmatpush1.msra.mxu0 %v420
    %453 = vmatprep.subr.mxu0 0.0
    %454 = vmatpush1.msra.mxu0 %v421
    %455 = vmatprep.subr.mxu0 0.0
    %456 = vmatpush1.msra.mxu0 %v422
    %457 = vmatprep.subr.mxu0 0.0
    %458 = vmatpush1.msra.mxu0 %v423
    %459 = vmatprep.subr.mxu0 0.0
    %460 = vmatpush1.msra.mxu0 %v424
    %461 = vmatprep.subr.mxu0 0.0
    %462 = vmatpush1.msra.mxu0 %v425
    %463 = vmatprep.subr.mxu0 0.0
    %464 = vmatpush1.msra.mxu0 %v426
    %465 = vmatprep.subr.mxu0 0.0
    %466 = vmatpush1.msra.mxu0 %v427
    %467 = vmatprep.subr.mxu0 0.0
    %468 = vmatpush1.msra.mxu0 %v428
    %469 = vmatprep.subr.mxu0 0.0
    %470 = vmatpush1.msra.mxu0 0.0
    %471 = vmatprep.subr.mxu0 0.0
    %472 = vmatpush1.msra.mxu0 0.0
    %473 = vmatprep.subr.mxu0 0.0
    %474 = vmatpush1.msra.mxu0 0.0
    %475 = vmatprep.subr.mxu0 0.0
    %476 = vmatpush1.msra.mxu0 0.0
    %477 = vmatprep.subr.mxu0 0.0
    %478 = vmatpush1.msra.mxu0 0.0
    %479 = vmatprep.subr.mxu0 0.0
    %480 = vmatpush1.msra.mxu0 0.0
    %481 = vmatprep.subr.mxu0 0.0
    %482 = vmatpush1.msra.mxu0 0.0
    %483 = vmatprep.subr.mxu0 0.0
    %484 = vmatpush1.msra.mxu0 0.0
    %485 = vmatprep.subr.mxu0 0.0
    %486 = vmatpush1.msra.mxu0 0.0
    %487 = vmatprep.subr.mxu0 0.0
    %488 = vmatpush1.msra.mxu0 0.0
    %489 = vmatprep.subr.mxu0 0.0
    %490 = vmatpush1.msra.mxu0 0.0
    %491 = vmatprep.subr.mxu0 0.0
    %492 = vmatpush1.msra.mxu0 0.0
    %493 = vmatprep.subr.mxu0 0.0
    %494 = vmatpush1.msra.mxu0 0.0
    %495 = vmatprep.subr.mxu0 0.0
    %496 = vmatpush1.msra.mxu0 0.0
    %497 = vmatprep.subr.mxu0 0.0
    %498 = vmatpush1.msra.mxu0 0.0
    %499 = vmatprep.subr.mxu0 0.0
    %500 = vmatpush1.msra.mxu0 0.0
    %501 = vmatprep.mubr.f32.mxu0 0.0
    %502 = vmatmul.mubr.f32.gmra.mrb[0].mxu0 %v411
    %v503 = vpop.f32.mrb[0].mxu0
    %v504 = vadd.f32 %v435, %v503
    %v505 = vpop.f32.mrb[0].mxu0
    %506 = vdwg.mxu0
    %v507 = vtanh.pop %v504
    %v508 = vld [vmem:[%s4] sm:$0xff]
    %v509 = vld [vmem:[%s4 + $0x8] sm:$0xff]
    %v510 = vld [vmem:[%s4 + $0x10] sm:$0xff]
    %v511 = vld [vmem:[%s4 + $0x18] sm:$0xff]
    %v512 = vld [vmem:[%s4 + $0x20] sm:$0xff]
    %v513 = vld [vmem:[%s4 + $0x28] sm:$0xff]
    %v514 = vld [vmem:[%s4 + $0x30] sm:$0xff]
    %v515 = vld [vmem:[%s4 + $0x38] sm:$0xff]
    %v516 = vld [vmem:[%s4 + $0x40] sm:$0xff]
    %v517 = vld [vmem:[%s4 + $0x48] sm:$0xff]
    %v518 = vld [vmem:[%s4 + $0x50] sm:$0xff]
    %v519 = vld [vmem:[%s4 + $0x58] sm:$0xff]
    %v520 = vld [vmem:[%s4 + $0x60] sm:$0xff]
    %v521 = vld [vmem:[%s4 + $0x68] sm:$0xff]
    %v522 = vld [vmem:[%s4 + $0x70] sm:$0xff]
    %v523 = vld [vmem:[%s4 + $0x78] sm:$0xff]
    %v524 = vld [vmem:[%s5] sm:$0x1]
    %v526 = vlaneseq
    %v527 = vshrl.u32 %v526, 7
    %v528 = vsub.s32 0, %v527
    %v529 = vrot.slane %v524, %v528
    %531 = vmatprep.subr.mxu0 0.0
    %532 = vmatpush1.msra.mxu0 %v508
    %533 = vmatprep.subr.mxu0 0.0
    %534 = vmatpush1.msra.mxu0 %v509
    %535 = vmatprep.subr.mxu0 0.0
    %536 = vmatpush1.msra.mxu0 %v510
    %537 = vmatprep.subr.mxu0 0.0
    %538 = vmatpush1.msra.mxu0 %v511
    %539 = vmatprep.subr.mxu0 0.0
    %540 = vmatpush1.msra.mxu0 %v512
    %541 = vmatprep.subr.mxu0 0.0
    %542 = vmatpush1.msra.mxu0 %v513
    %543 = vmatprep.subr.mxu0 0.0
    %544 = vmatpush1.msra.mxu0 %v514
    %545 = vmatprep.subr.mxu0 0.0
    %546 = vmatpush1.msra.mxu0 %v515
    %547 = vmatprep.subr.mxu0 0.0
    %548 = vmatpush1.msra.mxu0 %v516
    %549 = vmatprep.subr.mxu0 0.0
    %550 = vmatpush1.msra.mxu0 %v517
    %551 = vmatprep.subr.mxu0 0.0
    %552 = vmatpush1.msra.mxu0 %v518
    %553 = vmatprep.subr.mxu0 0.0
    %554 = vmatpush1.msra.mxu0 %v519
    %555 = vmatprep.subr.mxu0 0.0
    %556 = vmatpush1.msra.mxu0 %v520
    %557 = vmatprep.subr.mxu0 0.0
    %558 = vmatpush1.msra.mxu0 %v521
    %559 = vmatprep.subr.mxu0 0.0
    %560 = vmatpush1.msra.mxu0 %v522
    %561 = vmatprep.subr.mxu0 0.0
    %562 = vmatpush1.msra.mxu0 %v523
    %563 = vmatprep.subr.mxu0 0.0
    %564 = vmatpush1.msra.mxu0 0.0
    %565 = vmatprep.subr.mxu0 0.0
    %566 = vmatpush1.msra.mxu0 0.0
    %567 = vmatprep.subr.mxu0 0.0
    %568 = vmatpush1.msra.mxu0 0.0
    %569 = vmatprep.subr.mxu0 0.0
    %570 = vmatpush1.msra.mxu0 0.0
    %571 = vmatprep.subr.mxu0 0.0
    %572 = vmatpush1.msra.mxu0 0.0
    %573 = vmatprep.subr.mxu0 0.0
    %574 = vmatpush1.msra.mxu0 0.0
    %575 = vmatprep.subr.mxu0 0.0
    %576 = vmatpush1.msra.mxu0 0.0
    %577 = vmatprep.subr.mxu0 0.0
    %578 = vmatpush1.msra.mxu0 0.0
    %579 = vmatprep.subr.mxu0 0.0
    %580 = vmatpush1.msra.mxu0 0.0
    %581 = vmatprep.subr.mxu0 0.0
    %582 = vmatpush1.msra.mxu0 0.0
    %583 = vmatprep.subr.mxu0 0.0
    %584 = vmatpush1.msra.mxu0 0.0
    %585 = vmatprep.subr.mxu0 0.0
    %586 = vmatpush1.msra.mxu0 0.0
    %587 = vmatprep.subr.mxu0 0.0
    %588 = vmatpush1.msra.mxu0 0.0
    %589 = vmatprep.subr.mxu0 0.0
    %590 = vmatpush1.msra.mxu0 0.0
    %591 = vmatprep.subr.mxu0 0.0
    %592 = vmatpush1.msra.mxu0 0.0
    %593 = vmatprep.subr.mxu0 0.0
    %594 = vmatpush1.msra.mxu0 0.0
    %595 = vmatprep.mubr.f32.mxu0 0.0
    %596 = vmatmul.mubr.f32.gmra.mrb[0].mxu0 %v507
    %v597 = vpop.f32.mrb[0].mxu0
    %v598 = vadd.f32 %v529, %v597
    %v599 = vpop.f32.mrb[0].mxu0
    %600 = vdwg.mxu0
    %vm601 = vcmask 15360
    %602 = vst.msk [vmem:[%s6] sm:$0xff] %vm601, %v598
    // Predicated region
    $region30: #{tpu_custom_call.1} parent=1 // pred_check
      _
    $region31: #{tpu_custom_call.1} parent=1 // pred_check_branch
      %604 = sbr.rel (0) target = $region33
    $region32: #{tpu_custom_call.1} parent=1 // pred_region
      _
    $region33: #{tpu_custom_call.1} parent=1 // pred_fallthru
      _
    // Predicated region
    $region34: #{tpu_custom_call.1} parent=1 // pred_check
      _
    $region35: #{tpu_custom_call.1} parent=1 // pred_check_branch
      %606 = sbr.rel (0) target = $region37
    $region36: #{tpu_custom_call.1} parent=1 // pred_region
      _
    $region37: #{tpu_custom_call.1} parent=1 // pred_fallthru
      _
    %607 = vsyncpa [#allocation3], 1

</llo_original>
